<compile_context>
chip_gen: v7x
topology: tpu7x:2x2x1
jax: 0.10.0
libtpu: 0.0.40
codegen_flags: <defaults>
</compile_context>

<pallas_src>
import jax
import jax.numpy as jnp
from jax import lax
from jax.experimental import pallas as pl
from jax.experimental.pallas import tpu as pltpu

_EPS2 = 1e-24  # (torch F.normalize eps=1e-12)**2; only matters for ~zero rows


def _make_lse_kernel(tk, k_total, k_padded):
    """Kernel computing per-example log(sum_j exp(cos_sim(q_i, k_j)))."""
    needs_mask = k_padded != k_total  # static: only emit mask ops if K was padded

    def kernel(qn_ref, k_ref, lse_ref, l_sc):
        j = pl.program_id(1)

        @pl.when(j == 0)
        def _():
            l_sc[...] = jnp.zeros_like(l_sc)

        # Normalize the key tile in f32 (rsqrt-multiply, EUP slot), then feed
        # the MXU in the query dtype (bf16 inputs -> bf16 operands).
        k = k_ref[...].astype(jnp.float32)
        k_inv = lax.rsqrt(jnp.sum(k * k, axis=-1, keepdims=True) + _EPS2)
        kn = (k * k_inv).astype(qn_ref.dtype)

        # (TN, TK) logits; contract last dims directly (no explicit k.T).
        logits = lax.dot_general(
            qn_ref[...],
            kn,
            dimension_numbers=(((1,), (1,)), ((), ())),
            preferred_element_type=jnp.float32,
        )

        # Cosine-similarity logits are bounded in [-1, 1]: exp cannot overflow
        # and the f32 sum cannot overflow for any realistic K, so no online
        # max / rescale is required.
        e = jnp.exp(logits)
        if needs_mask:
            # Zero-padded key rows would contribute exp(0)=1 — mask them out.
            col = j * tk + lax.broadcasted_iota(jnp.int32, logits.shape, 1)
            e = jnp.where(col < k_total, e, 0.0)
        l_sc[...] += jnp.sum(e, axis=-1, keepdims=True)

        @pl.when(j == pl.num_programs(1) - 1)
        def _():
            lse_ref[...] = jnp.log(l_sc[...])

    return kernel


def _vmem_limit_bytes():
    """Per-generation VMEM budget: physical minus ~16 MiB headroom, capped."""
    phys = 64 * 1024 * 1024  # conservative default = v7x physical VMEM
    try:
        info = pltpu.get_tpu_info()
        phys = int(getattr(info, "vmem_capacity_bytes", phys))
    except Exception:
        pass
    return int(min(phys - 16 * 1024 * 1024, 110 * 1024 * 1024))


def full_batch_cross_entropy_loss(
    query_embeddings,   # (B, S, D) float (f32 or bf16)
    key_embeddings,     # (K, D) float (f32 or bf16)
    label_locations,    # (N, 2) int
    labels,             # (N,) int
    *,
    normalize=True,
    tk=2048,            # key-tile size (sweepable); clamped to K
    tn=256,             # N-tile size; used only when N > tn
):
    assert normalize, "kernel implements the normalize=True configuration"

    # ---- XLA glue: gathers + O(N*D) per-example prep (done once) ---------
    q = query_embeddings[label_locations[:, 0], label_locations[:, 1]]  # (N, D)
    n, d = q.shape
    k_total, dk = key_embeddings.shape
    assert d == dk

    compute_dtype = (
        query_embeddings.dtype
        if query_embeddings.dtype in (jnp.bfloat16, jnp.float16)
        else jnp.float32
    )

    # Query normalization hoisted out of the kernel entirely.
    qf = q.astype(jnp.float32)
    qn_f32 = qf * lax.rsqrt(jnp.sum(qf * qf, axis=-1, keepdims=True) + _EPS2)
    qn = qn_f32.astype(compute_dtype)

    # Label-logit z_i computed once outside the K-streaming loop.
    k_lab = key_embeddings[labels].astype(jnp.float32)                  # (N, D)
    k_lab = k_lab * lax.rsqrt(jnp.sum(k_lab * k_lab, axis=-1, keepdims=True) + _EPS2)
    z = jnp.sum(qn_f32 * k_lab, axis=-1)                                # (N,)

    # ---- tiling -----------------------------------------------------------
    tk = min(tk, k_total)
    if tk < k_total:
        tk = max(8, (tk // 8) * 8)           # sublane-aligned partial tiles
    k_padded = pl.cdiv(k_total, tk) * tk
    key_in = key_embeddings
    if k_padded != k_total:
        key_in = jnp.pad(key_embeddings, ((0, k_padded - k_total), (0, 0)))

    # Tile N only when it is large enough to be compute-bound; small N keeps a
    # single resident (N, D) query block (cheapest, no key re-streaming).
    if n > tn:
        n_padded = pl.cdiv(n, tn) * tn
        if n_padded != n:
            qn = jnp.pad(qn, ((0, n_padded - n), (0, 0)))
    else:
        tn = n
        n_padded = n

    grid = (n_padded // tn, k_padded // tk)
    kernel = _make_lse_kernel(tk, k_total, k_padded)

    lse = pl.pallas_call(
        kernel,
        out_shape=jax.ShapeDtypeStruct((n_padded, 1), jnp.float32),
        grid_spec=pltpu.PrefetchScalarGridSpec(
            num_scalar_prefetch=0,
            grid=grid,
            in_specs=[
                pl.BlockSpec((tn, d), lambda i, j: (i, 0)),   # normalized queries
                pl.BlockSpec((tk, d), lambda i, j: (j, 0)),   # streamed key tile
            ],
            out_specs=pl.BlockSpec((tn, 1), lambda i, j: (i, 0)),
            scratch_shapes=[
                pltpu.VMEM((tn, 1), jnp.float32),  # running sum of exp(logits)
            ],
        ),
        compiler_params=pltpu.CompilerParams(
            dimension_semantics=("parallel", "arbitrary"),
            vmem_limit_bytes=_vmem_limit_bytes(),
        ),
    )(qn, key_in)

    per_example = lse[:n, 0] - z       # CE_i = logsumexp_i - logit_i[label_i]
    return jnp.mean(per_example)


def _reference(query_embeddings, key_embeddings, label_locations, labels):
    q = query_embeddings[label_locations[:, 0], label_locations[:, 1]]
    q = q / jnp.maximum(jnp.linalg.norm(q, axis=-1, keepdims=True), 1e-12)
    k = key_embeddings / jnp.maximum(
        jnp.linalg.norm(key_embeddings, axis=-1, keepdims=True), 1e-12
    )
    logits = q.astype(jnp.float32) @ k.astype(jnp.float32).T
    logz = jax.scipy.special.logsumexp(logits, axis=-1)
    lab_logit = jnp.take_along_axis(logits, labels[:, None], axis=-1)[:, 0]
    return jnp.mean(logz - lab_logit)


if __name__ == "__main__":
    key = jax.random.PRNGKey(0)
    kq, kk, kb, ks, kl = jax.random.split(key, 5)

    B, S, D = 2, 8, 32      # query embedding table: batch, seq, hidden
    K = 256                 # number of candidate key embeddings
    N = 8                   # number of labeled positions

    query_embeddings = jax.random.normal(kq, (B, S, D), dtype=jnp.float32)
    key_embeddings = jax.random.normal(kk, (K, D), dtype=jnp.float32)
    label_locations = jnp.stack(
        [
            jax.random.randint(kb, (N,), 0, B, dtype=jnp.int32),
            jax.random.randint(ks, (N,), 0, S, dtype=jnp.int32),
        ],
        axis=1,
    )
    labels = jax.random.randint(kl, (N,), 0, K, dtype=jnp.int32)

    loss = full_batch_cross_entropy_loss(
        query_embeddings, key_embeddings, label_locations, labels
    )
    loss = jax.block_until_ready(loss)

    ref = _reference(query_embeddings, key_embeddings, label_locations, labels)
    assert jnp.allclose(loss, ref, atol=1e-5, rtol=1e-5), (loss, ref)

    print("KERNEL_OK")
</pallas_src>

<mosaic_0001>
module attributes {stable_mosaic.version = 11 : i64} {
  func.func @kernel(%arg0: i32, %arg1: i32, %arg2: memref<8x32xf32, #tpu.memory_space<vmem>>, %arg3: memref<256x32xf32, #tpu.memory_space<vmem>>, %arg4: memref<8x1xf32, #tpu.memory_space<vmem>>, %arg5: memref<8x1xf32, #tpu.memory_space<vmem>>) attributes {dimension_semantics = [#tpu.dimension_semantics<parallel>, #tpu.dimension_semantics<arbitrary>], iteration_bounds = array<i64: 1, 1>, scalar_prefetch = 0 : i64, scratch_operands = 1 : i64, tpu.core_type = #tpu.core_type<tc>, window_params = [{transform_indices = @transform_0, window_bounds = array<i64: 8, 32>}, {transform_indices = @transform_1, window_bounds = array<i64: 256, 32>}, {transform_indices = @transform_2, window_bounds = array<i64: 8, 1>}]} {
    %c0_i32 = arith.constant 0 : i32
    %0 = arith.cmpi eq, %arg1, %c0_i32 : i32
    %1 = arith.extui %0 : i1 to i32
    %c0_i32_0 = arith.constant 0 : i32
    %2 = arith.cmpi ne, %1, %c0_i32_0 : i32
    scf.if %2 {
      %cst_13 = arith.constant 0.000000e+00 : f32
      %23 = vector.broadcast %cst_13 : f32 to vector<8x1xf32>
      %c0_14 = arith.constant 0 : index
      %c0_15 = arith.constant 0 : index
      %24 = vector.load %arg5[%c0_14, %c0_15] : memref<8x1xf32, #tpu.memory_space<vmem>>, vector<8x1xf32>
      tpu.vector_store %arg5[%c0_14, %c0_15], %23 {strides = array<i32>} : memref<8x1xf32, #tpu.memory_space<vmem>>, vector<8x1xf32>,
    } else {
    }
    %c0 = arith.constant 0 : index
    %c0_1 = arith.constant 0 : index
    %3 = vector.load %arg3[%c0, %c0_1] : memref<256x32xf32, #tpu.memory_space<vmem>>, vector<256x32xf32>
    %4 = arith.mulf %3, %3 : vector<256x32xf32>
    %cst = arith.constant dense<0.000000e+00> : vector<256xf32>
    %5 = vector.multi_reduction <add>, %4, %cst [1] : vector<256x32xf32> to vector<256xf32>
    %6 = vector.shape_cast %5 : vector<256xf32> to vector<256x1xf32>
    %cst_2 = arith.constant 1.000000e-24 : f32
    %7 = vector.broadcast %cst_2 : f32 to vector<256x1xf32>
    %8 = arith.addf %6, %7 : vector<256x1xf32>
    %9 = math.rsqrt %8 : vector<256x1xf32>
    %10 = vector.broadcast %9 : vector<256x1xf32> to vector<256x32xf32>
    %11 = arith.mulf %3, %10 : vector<256x32xf32>
    %c0_3 = arith.constant 0 : index
    %c0_4 = arith.constant 0 : index
    %12 = vector.load %arg2[%c0_3, %c0_4] : memref<8x32xf32, #tpu.memory_space<vmem>>, vector<8x32xf32>
    %cst_5 = arith.constant dense<0.000000e+00> : vector<8x256xf32>
    %13 = tpu.matmul %12, %11, %cst_5 {dimension_numbers = #tpu.dot_dimension_numbers<[1], [1], [0], [0], [0, 0, 1, 0], [], []>} : vector<8x32xf32>, vector<256x32xf32>, vector<8x256xf32> -> vector<8x256xf32>
    %14 = math.exp %13 : vector<8x256xf32>
    %c0_6 = arith.constant 0 : index
    %c0_7 = arith.constant 0 : index
    %15 = vector.load %arg5[%c0_6, %c0_7] : memref<8x1xf32, #tpu.memory_space<vmem>>, vector<8x1xf32>
    %cst_8 = arith.constant dense<0.000000e+00> : vector<8xf32>
    %16 = vector.multi_reduction <add>, %14, %cst_8 [1] : vector<8x256xf32> to vector<8xf32>
    %17 = vector.shape_cast %16 : vector<8xf32> to vector<8x1xf32>
    %18 = arith.addf %15, %17 : vector<8x1xf32>
    %c0_9 = arith.constant 0 : index
    %c0_10 = arith.constant 0 : index
    %19 = vector.load %arg5[%c0_9, %c0_10] : memref<8x1xf32, #tpu.memory_space<vmem>>, vector<8x1xf32>
    tpu.vector_store %arg5[%c0_9, %c0_10], %18 {strides = array<i32>} : memref<8x1xf32, #tpu.memory_space<vmem>>, vector<8x1xf32>,
    %c0_i32_11 = arith.constant 0 : i32
    %20 = arith.cmpi eq, %arg1, %c0_i32_11 : i32
    %21 = arith.extui %20 : i1 to i32
    %c0_i32_12 = arith.constant 0 : i32
    %22 = arith.cmpi ne, %21, %c0_i32_12 : i32
    scf.if %22 {
      %c0_13 = arith.constant 0 : index
      %c0_14 = arith.constant 0 : index
      %23 = vector.load %arg5[%c0_13, %c0_14] : memref<8x1xf32, #tpu.memory_space<vmem>>, vector<8x1xf32>
      %24 = math.log %23 : vector<8x1xf32>
      %c0_15 = arith.constant 0 : index
      %c0_16 = arith.constant 0 : index
      %25 = vector.load %arg4[%c0_15, %c0_16] : memref<8x1xf32, #tpu.memory_space<vmem>>, vector<8x1xf32>
      tpu.vector_store %arg4[%c0_15, %c0_16], %24 {strides = array<i32>} : memref<8x1xf32, #tpu.memory_space<vmem>>, vector<8x1xf32>,
    } else {
    }
    return
  }
  func.func @transform_0(%arg0: i32, %arg1: i32) -> (i32, i32) {
    %c0_i32 = arith.constant 0 : i32
    %c0_i32_0 = arith.constant 0 : i32
    return %arg0, %c0_i32 : i32, i32
  }
  func.func @transform_1(%arg0: i32, %arg1: i32) -> (i32, i32) {
    %c0_i32 = arith.constant 0 : i32
    %c0_i32_0 = arith.constant 0 : i32
    return %arg1, %c0_i32 : i32, i32
  }
  func.func @transform_2(%arg0: i32, %arg1: i32) -> (i32, i32) {
    %c0_i32 = arith.constant 0 : i32
    %c0_i32_0 = arith.constant 0 : i32
    return %arg0, %c0_i32 : i32, i32
  }
}

</mosaic_0001>

<llo_original>
// kernel: tpu_custom_call.1
$region0: #{tpu_custom_call.1}
  #allocation0 [shape = 'u32[]', space=smem, size = 0x4, offset = 0x4, fixed_abs, tag = 'smem constant byte address 0x4 - core index']
  #allocation1 [shape = 'u32[144,128]{1,0:T(1,128)}', space=vmem, size = 0x12000, scoped, tag = 'internal scratch']
  #allocation2 [shape = 'f32[8,1]{1,0:T(8,128)}', space=vmem, size = 0x1000, scoped, tag = 'scratch operand']
  %s0 = inlined_call_operand.vmem [shape: f32[8,32], index: 0, kind: input, shape index: {}]
  %s1 = inlined_call_operand.vmem [shape: f32[256,32], index: 1, kind: input, shape index: {}]
  %s2 = inlined_call_operand.vmem [shape: f32[8,1], index: 2, kind: output, shape index: {}]
  %s3 = sld [smem:[#allocation0]]
  $region26: #{tpu_custom_call.1} parent=0
    _
  %s5 = ssub.s32 1, %s3
  %s6 = scalar_select 0, %s5, %s3
  // Predicated region
  $region2: #{tpu_custom_call.1} parent=0 // pred_check
    _
  $region3: #{tpu_custom_call.1} parent=0 // pred_check_branch
    %8 = sbr.rel (0) target = $region5
  $region4: #{tpu_custom_call.1} parent=0 // pred_region
    _
  $region5: #{tpu_custom_call.1} parent=0 // pred_fallthru
    _
  // Predicated region
  $region6: #{tpu_custom_call.1} parent=0 // pred_check
    _
  $region7: #{tpu_custom_call.1} parent=0 // pred_check_branch
    %10 = sbr.rel (0) target = $region9
  $region8: #{tpu_custom_call.1} parent=0 // pred_region
    _
  $region9: #{tpu_custom_call.1} parent=0 // pred_fallthru
    _
  %p11 = scmp.eq.s32.totalorder 0, 0
  // Predicated region
  $region10: #{tpu_custom_call.1} parent=0 // pred_check
    %p12 = pneg %p11
  $region11: #{tpu_custom_call.1} parent=0 // pred_check_branch
    %14 = sbr.rel (%p12) target = $region13
  $region12: #{tpu_custom_call.1} parent=0 // pred_region
    %vm15 = vcmask 7168
    %16 = vst.msk [vmem:[#allocation2] sm:$0xff] %vm15, 0.0
  $region13: #{tpu_custom_call.1} parent=0 // pred_fallthru
    _
  %v17 = vld [vmem:[%s1] sm:$0xff]
  %v18 = vld [vmem:[%s1 + $0x8] sm:$0xff]
  %v19 = vld [vmem:[%s1 + $0x10] sm:$0xff]
  %v20 = vld [vmem:[%s1 + $0x18] sm:$0xff]
  %v21 = vld [vmem:[%s1 + $0x20] sm:$0xff]
  %v22 = vld [vmem:[%s1 + $0x28] sm:$0xff]
  %v23 = vld [vmem:[%s1 + $0x30] sm:$0xff]
  %v24 = vld [vmem:[%s1 + $0x38] sm:$0xff]
  %v25 = vld [vmem:[%s1 + $0x40] sm:$0xff]
  %v26 = vld [vmem:[%s1 + $0x48] sm:$0xff]
  %v27 = vld [vmem:[%s1 + $0x50] sm:$0xff]
  %v28 = vld [vmem:[%s1 + $0x58] sm:$0xff]
  %v29 = vld [vmem:[%s1 + $0x60] sm:$0xff]
  %v30 = vld [vmem:[%s1 + $0x68] sm:$0xff]
  %v31 = vld [vmem:[%s1 + $0x70] sm:$0xff]
  %v32 = vld [vmem:[%s1 + $0x78] sm:$0xff]
  %v33 = vld [vmem:[%s1 + $0x80] sm:$0xff]
  %v34 = vld [vmem:[%s1 + $0x88] sm:$0xff]
  %v35 = vld [vmem:[%s1 + $0x90] sm:$0xff]
  %v36 = vld [vmem:[%s1 + $0x98] sm:$0xff]
  %v37 = vld [vmem:[%s1 + $0xa0] sm:$0xff]
  %v38 = vld [vmem:[%s1 + $0xa8] sm:$0xff]
  %v39 = vld [vmem:[%s1 + $0xb0] sm:$0xff]
  %v40 = vld [vmem:[%s1 + $0xb8] sm:$0xff]
  %v41 = vld [vmem:[%s1 + $0xc0] sm:$0xff]
  %v42 = vld [vmem:[%s1 + $0xc8] sm:$0xff]
  %v43 = vld [vmem:[%s1 + $0xd0] sm:$0xff]
  %v44 = vld [vmem:[%s1 + $0xd8] sm:$0xff]
  %v45 = vld [vmem:[%s1 + $0xe0] sm:$0xff]
  %v46 = vld [vmem:[%s1 + $0xe8] sm:$0xff]
  %v47 = vld [vmem:[%s1 + $0xf0] sm:$0xff]
  %v48 = vld [vmem:[%s1 + $0xf8] sm:$0xff]
  %v49 = vmul.f32 %v17, %v17
  %v50 = vmul.f32 %v18, %v18
  %v51 = vmul.f32 %v19, %v19
  %v52 = vmul.f32 %v20, %v20
  %v53 = vmul.f32 %v21, %v21
  %v54 = vmul.f32 %v22, %v22
  %v55 = vmul.f32 %v23, %v23
  %v56 = vmul.f32 %v24, %v24
  %v57 = vmul.f32 %v25, %v25
  %v58 = vmul.f32 %v26, %v26
  %v59 = vmul.f32 %v27, %v27
  %v60 = vmul.f32 %v28, %v28
  %v61 = vmul.f32 %v29, %v29
  %v62 = vmul.f32 %v30, %v30
  %v63 = vmul.f32 %v31, %v31
  %v64 = vmul.f32 %v32, %v32
  %v65 = vmul.f32 %v33, %v33
  %v66 = vmul.f32 %v34, %v34
  %v67 = vmul.f32 %v35, %v35
  %v68 = vmul.f32 %v36, %v36
  %v69 = vmul.f32 %v37, %v37
  %v70 = vmul.f32 %v38, %v38
  %v71 = vmul.f32 %v39, %v39
  %v72 = vmul.f32 %v40, %v40
  %v73 = vmul.f32 %v41, %v41
  %v74 = vmul.f32 %v42, %v42
  %v75 = vmul.f32 %v43, %v43
  %v76 = vmul.f32 %v44, %v44
  %v77 = vmul.f32 %v45, %v45
  %v78 = vmul.f32 %v46, %v46
  %v79 = vmul.f32 %v47, %v47
  %v80 = vmul.f32 %v48, %v48
  %vm81 = vcmask 261120
  %v82 = vsel %vm81, %v49, 0.0
  %83 = vadd.xlane.f32.xlu0 %v82
  %v84 = vpop.xlane.xlu0 %83
  %v85 = vsel %vm81, %v50, 0.0
  %86 = vadd.xlane.f32.xlu0 %v85
  %v87 = vpop.xlane.xlu0 %86
  %v88 = vsel %vm81, %v51, 0.0
  %89 = vadd.xlane.f32.xlu0 %v88
  %v90 = vpop.xlane.xlu0 %89
  %v91 = vsel %vm81, %v52, 0.0
  %92 = vadd.xlane.f32.xlu0 %v91
  %v93 = vpop.xlane.xlu0 %92
  %v94 = vsel %vm81, %v53, 0.0
  %95 = vadd.xlane.f32.xlu0 %v94
  %v96 = vpop.xlane.xlu0 %95
  %v97 = vsel %vm81, %v54, 0.0
  %98 = vadd.xlane.f32.xlu0 %v97
  %v99 = vpop.xlane.xlu0 %98
  %v100 = vsel %vm81, %v55, 0.0
  %101 = vadd.xlane.f32.xlu0 %v100
  %v102 = vpop.xlane.xlu0 %101
  %v103 = vsel %vm81, %v56, 0.0
  %104 = vadd.xlane.f32.xlu0 %v103
  %v105 = vpop.xlane.xlu0 %104
  %v106 = vsel %vm81, %v57, 0.0
  %107 = vadd.xlane.f32.xlu0 %v106
  %v108 = vpop.xlane.xlu0 %107
  %v109 = vsel %vm81, %v58, 0.0
  %110 = vadd.xlane.f32.xlu0 %v109
  %v111 = vpop.xlane.xlu0 %110
  %v112 = vsel %vm81, %v59, 0.0
  %113 = vadd.xlane.f32.xlu0 %v112
  %v114 = vpop.xlane.xlu0 %113
  %v115 = vsel %vm81, %v60, 0.0
  %116 = vadd.xlane.f32.xlu0 %v115
  %v117 = vpop.xlane.xlu0 %116
  %v118 = vsel %vm81, %v61, 0.0
  %119 = vadd.xlane.f32.xlu0 %v118
  %v120 = vpop.xlane.xlu0 %119
  %v121 = vsel %vm81, %v62, 0.0
  %122 = vadd.xlane.f32.xlu0 %v121
  %v123 = vpop.xlane.xlu0 %122
  %v124 = vsel %vm81, %v63, 0.0
  %125 = vadd.xlane.f32.xlu0 %v124
  %v126 = vpop.xlane.xlu0 %125
  %v127 = vsel %vm81, %v64, 0.0
  %128 = vadd.xlane.f32.xlu0 %v127
  %v129 = vpop.xlane.xlu0 %128
  %v130 = vsel %vm81, %v65, 0.0
  %131 = vadd.xlane.f32.xlu0 %v130
  %v132 = vpop.xlane.xlu0 %131
  %v133 = vsel %vm81, %v66, 0.0
  %134 = vadd.xlane.f32.xlu0 %v133
  %v135 = vpop.xlane.xlu0 %134
  %v136 = vsel %vm81, %v67, 0.0
  %137 = vadd.xlane.f32.xlu0 %v136
  %v138 = vpop.xlane.xlu0 %137
  %v139 = vsel %vm81, %v68, 0.0
  %140 = vadd.xlane.f32.xlu0 %v139
  %v141 = vpop.xlane.xlu0 %140
  %v142 = vsel %vm81, %v69, 0.0
  %143 = vadd.xlane.f32.xlu0 %v142
  %v144 = vpop.xlane.xlu0 %143
  %v145 = vsel %vm81, %v70, 0.0
  %146 = vadd.xlane.f32.xlu0 %v145
  %v147 = vpop.xlane.xlu0 %146
  %v148 = vsel %vm81, %v71, 0.0
  %149 = vadd.xlane.f32.xlu0 %v148
  %v150 = vpop.xlane.xlu0 %149
  %v151 = vsel %vm81, %v72, 0.0
  %152 = vadd.xlane.f32.xlu0 %v151
  %v153 = vpop.xlane.xlu0 %152
  %v154 = vsel %vm81, %v73, 0.0
  %155 = vadd.xlane.f32.xlu0 %v154
  %v156 = vpop.xlane.xlu0 %155
  %v157 = vsel %vm81, %v74, 0.0
  %158 = vadd.xlane.f32.xlu0 %v157
  %v159 = vpop.xlane.xlu0 %158
  %v160 = vsel %vm81, %v75, 0.0
  %161 = vadd.xlane.f32.xlu0 %v160
  %v162 = vpop.xlane.xlu0 %161
  %v163 = vsel %vm81, %v76, 0.0
  %164 = vadd.xlane.f32.xlu0 %v163
  %v165 = vpop.xlane.xlu0 %164
  %v166 = vsel %vm81, %v77, 0.0
  %167 = vadd.xlane.f32.xlu0 %v166
  %v168 = vpop.xlane.xlu0 %167
  %v169 = vsel %vm81, %v78, 0.0
  %170 = vadd.xlane.f32.xlu0 %v169
  %v171 = vpop.xlane.xlu0 %170
  %v172 = vsel %vm81, %v79, 0.0
  %173 = vadd.xlane.f32.xlu0 %v172
  %v174 = vpop.xlane.xlu0 %173
  %v175 = vsel %vm81, %v80, 0.0
  %176 = vadd.xlane.f32.xlu0 %v175
  %v177 = vpop.xlane.xlu0 %176
  %v178 = vadd.f32 %v84, 1e-24
  %v179 = vadd.f32 %v87, 1e-24
  %v180 = vadd.f32 %v90, 1e-24
  %v181 = vadd.f32 %v93, 1e-24
  %v182 = vadd.f32 %v96, 1e-24
  %v183 = vadd.f32 %v99, 1e-24
  %v184 = vadd.f32 %v102, 1e-24
  %v185 = vadd.f32 %v105, 1e-24
  %v186 = vadd.f32 %v108, 1e-24
  %v187 = vadd.f32 %v111, 1e-24
  %v188 = vadd.f32 %v114, 1e-24
  %v189 = vadd.f32 %v117, 1e-24
  %v190 = vadd.f32 %v120, 1e-24
  %v191 = vadd.f32 %v123, 1e-24
  %v192 = vadd.f32 %v126, 1e-24
  %v193 = vadd.f32 %v129, 1e-24
  %v194 = vadd.f32 %v132, 1e-24
  %v195 = vadd.f32 %v135, 1e-24
  %v196 = vadd.f32 %v138, 1e-24
  %v197 = vadd.f32 %v141, 1e-24
  %v198 = vadd.f32 %v144, 1e-24
  %v199 = vadd.f32 %v147, 1e-24
  %v200 = vadd.f32 %v150, 1e-24
  %v201 = vadd.f32 %v153, 1e-24
  %v202 = vadd.f32 %v156, 1e-24
  %v203 = vadd.f32 %v159, 1e-24
  %v204 = vadd.f32 %v162, 1e-24
  %v205 = vadd.f32 %v165, 1e-24
  %v206 = vadd.f32 %v168, 1e-24
  %v207 = vadd.f32 %v171, 1e-24
  %v208 = vadd.f32 %v174, 1e-24
  %v209 = vadd.f32 %v177, 1e-24
  %v210 = vrsqrt.pop %v178
  %v211 = vrsqrt.pop %v179
  %v212 = vrsqrt.pop %v180
  %v213 = vrsqrt.pop %v181
  %v214 = vrsqrt.pop %v182
  %v215 = vrsqrt.pop %v183
  %v216 = vrsqrt.pop %v184
  %v217 = vrsqrt.pop %v185
  %v218 = vrsqrt.pop %v186
  %v219 = vrsqrt.pop %v187
  %v220 = vrsqrt.pop %v188
  %v221 = vrsqrt.pop %v189
  %v222 = vrsqrt.pop %v190
  %v223 = vrsqrt.pop %v191
  %v224 = vrsqrt.pop %v192
  %v225 = vrsqrt.pop %v193
  %v226 = vrsqrt.pop %v194
  %v227 = vrsqrt.pop %v195
  %v228 = vrsqrt.pop %v196
  %v229 = vrsqrt.pop %v197
  %v230 = vrsqrt.pop %v198
  %v231 = vrsqrt.pop %v199
  %v232 = vrsqrt.pop %v200
  %v233 = vrsqrt.pop %v201
  %v234 = vrsqrt.pop %v202
  %v235 = vrsqrt.pop %v203
  %v236 = vrsqrt.pop %v204
  %v237 = vrsqrt.pop %v205
  %v238 = vrsqrt.pop %v206
  %v239 = vrsqrt.pop %v207
  %v240 = vrsqrt.pop %v208
  %v241 = vrsqrt.pop %v209
  %v242 = vmul.f32 %v17, %v210
  %v243 = vmul.f32 %v18, %v211
  %v244 = vmul.f32 %v19, %v212
  %v245 = vmul.f32 %v20, %v213
  %v246 = vmul.f32 %v21, %v214
  %v247 = vmul.f32 %v22, %v215
  %v248 = vmul.f32 %v23, %v216
  %v249 = vmul.f32 %v24, %v217
  %v250 = vmul.f32 %v25, %v218
  %v251 = vmul.f32 %v26, %v219
  %v252 = vmul.f32 %v27, %v220
  %v253 = vmul.f32 %v28, %v221
  %v254 = vmul.f32 %v29, %v222
  %v255 = vmul.f32 %v30, %v223
  %v256 = vmul.f32 %v31, %v224
  %v257 = vmul.f32 %v32, %v225
  %v258 = vmul.f32 %v33, %v226
  %v259 = vmul.f32 %v34, %v227
  %v260 = vmul.f32 %v35, %v228
  %v261 = vmul.f32 %v36, %v229
  %v262 = vmul.f32 %v37, %v230
  %v263 = vmul.f32 %v38, %v231
  %v264 = vmul.f32 %v39, %v232
  %v265 = vmul.f32 %v40, %v233
  %v266 = vmul.f32 %v41, %v234
  %v267 = vmul.f32 %v42, %v235
  %v268 = vmul.f32 %v43, %v236
  %v269 = vmul.f32 %v44, %v237
  %v270 = vmul.f32 %v45, %v238
  %v271 = vmul.f32 %v46, %v239
  %v272 = vmul.f32 %v47, %v240
  %v273 = vmul.f32 %v48, %v241
  %v274 = vld [vmem:[%s0] sm:$0xff]
  %v276 = vsel %vm81, %v274, 0
  %v279 = vsel %vm81, %v242, 0
  %v282 = vsel %vm81, %v243, 0
  %v285 = vsel %vm81, %v244, 0
  %v288 = vsel %vm81, %v245, 0
  %v291 = vsel %vm81, %v246, 0
  %v294 = vsel %vm81, %v247, 0
  %v297 = vsel %vm81, %v248, 0
  %v300 = vsel %vm81, %v249, 0
  %v303 = vsel %vm81, %v250, 0
  %v306 = vsel %vm81, %v251, 0
  %v309 = vsel %vm81, %v252, 0
  %v312 = vsel %vm81, %v253, 0
  %v315 = vsel %vm81, %v254, 0
  %v318 = vsel %vm81, %v255, 0
  %v321 = vsel %vm81, %v256, 0
  %v324 = vsel %vm81, %v257, 0
  %v327 = vsel %vm81, %v258, 0
  %v330 = vsel %vm81, %v259, 0
  %v333 = vsel %vm81, %v260, 0
  %v336 = vsel %vm81, %v261, 0
  %v339 = vsel %vm81, %v262, 0
  %v342 = vsel %vm81, %v263, 0
  %v345 = vsel %vm81, %v264, 0
  %v348 = vsel %vm81, %v265, 0
  %v351 = vsel %vm81, %v266, 0
  %v354 = vsel %vm81, %v267, 0
  %v357 = vsel %vm81, %v268, 0
  %v360 = vsel %vm81, %v269, 0
  %v363 = vsel %vm81, %v270, 0
  %v366 = vsel %vm81, %v271, 0
  %v369 = vsel %vm81, %v272, 0
  %v372 = vsel %vm81, %v273, 0
  %374 = vmatprep.subr.mxu0 0.0
  %375 = vmatpush1.xpose.msra.mxu0 %v279
  %376 = vmatprep.subr.mxu0 0.0
  %377 = vmatpush1.xpose.msra.mxu0 %v282
  %378 = vmatprep.subr.mxu0 0.0
  %379 = vmatpush1.xpose.msra.mxu0 %v285
  %380 = vmatprep.subr.mxu0 0.0
  %381 = vmatpush1.xpose.msra.mxu0 %v288
  %382 = vmatprep.subr.mxu0 0.0
  %383 = vmatpush1.xpose.msra.mxu0 %v291
  %384 = vmatprep.subr.mxu0 0.0
  %385 = vmatpush1.xpose.msra.mxu0 %v294
  %386 = vmatprep.subr.mxu0 0.0
  %387 = vmatpush1.xpose.msra.mxu0 %v297
  %388 = vmatprep.subr.mxu0 0.0
  %389 = vmatpush1.xpose.msra.mxu0 %v300
  %390 = vmatprep.subr.mxu0 0.0
  %391 = vmatpush1.xpose.msra.mxu0 %v303
  %392 = vmatprep.subr.mxu0 0.0
  %393 = vmatpush1.xpose.msra.mxu0 %v306
  %394 = vmatprep.subr.mxu0 0.0
  %395 = vmatpush1.xpose.msra.mxu0 %v309
  %396 = vmatprep.subr.mxu0 0.0
  %397 = vmatpush1.xpose.msra.mxu0 %v312
  %398 = vmatprep.subr.mxu0 0.0
  %399 = vmatpush1.xpose.msra.mxu0 %v315
  %400 = vmatprep.subr.mxu0 0.0
  %401 = vmatpush1.xpose.msra.mxu0 %v318
  %402 = vmatprep.subr.mxu0 0.0
  %403 = vmatpush1.xpose.msra.mxu0 %v321
  %404 = vmatprep.subr.mxu0 0.0
  %405 = vmatpush1.xpose.msra.mxu0 %v324
  %406 = vmatprep.subr.mxu0 0.0
  %407 = vmatpush1.xpose.msra.mxu0 %v327
  %408 = vmatprep.subr.mxu0 0.0
  %409 = vmatpush1.xpose.msra.mxu0 %v330
  %410 = vmatprep.subr.mxu0 0.0
  %411 = vmatpush1.xpose.msra.mxu0 %v333
  %412 = vmatprep.subr.mxu0 0.0
  %413 = vmatpush1.xpose.msra.mxu0 %v336
  %414 = vmatprep.subr.mxu0 0.0
  %415 = vmatpush1.xpose.msra.mxu0 %v339
  %416 = vmatprep.subr.mxu0 0.0
  %417 = vmatpush1.xpose.msra.mxu0 %v342
  %418 = vmatprep.subr.mxu0 0.0
  %419 = vmatpush1.xpose.msra.mxu0 %v345
  %420 = vmatprep.subr.mxu0 0.0
  %421 = vmatpush1.xpose.msra.mxu0 %v348
  %422 = vmatprep.subr.mxu0 0.0
  %423 = vmatpush1.xpose.msra.mxu0 %v351
  %424 = vmatprep.subr.mxu0 0.0
  %425 = vmatpush1.xpose.msra.mxu0 %v354
  %426 = vmatprep.subr.mxu0 0.0
  %427 = vmatpush1.xpose.msra.mxu0 %v357
  %428 = vmatprep.subr.mxu0 0.0
  %429 = vmatpush1.xpose.msra.mxu0 %v360
  %430 = vmatprep.subr.mxu0 0.0
  %431 = vmatpush1.xpose.msra.mxu0 %v363
  %432 = vmatprep.subr.mxu0 0.0
  %433 = vmatpush1.xpose.msra.mxu0 %v366
  %434 = vmatprep.subr.mxu0 0.0
  %435 = vmatpush1.xpose.msra.mxu0 %v369
  %436 = vmatprep.subr.mxu0 0.0
  %437 = vmatpush1.xpose.msra.mxu0 %v372
  %438 = vmatprep.mubr.f32.mxu0 0.0
  %439 = vmatmul.mubr.f32.gmra.mrb[0].mxu0 %v276
  %v440 = vpop.f32.mrb[0].mxu0
  %v441 = vadd.f32 0.0, %v440
  %v442 = vpop.f32.mrb[0].mxu0
  %v443 = vadd.f32 0.0, %v442
  %444 = vdwg.mxu0
  %v445 = vmul.f32 %v441, 1.442695
  %v446 = vpow.pop %v445
  %v447 = vmul.f32 %v443, 1.442695
  %v448 = vpow.pop %v447
  %v449 = vld [vmem:[#allocation2] sm:$0xff]
  %v450 = vadd.f32 %v446, %v448
  %451 = vadd.xlane.f32.xlu0 %v450
  %v452 = vpop.xlane.xlu0 %451
  %v453 = vadd.f32 %v449, %v452
  %vm454 = vcmask 7168
  %455 = vst.msk [vmem:[#allocation2] sm:$0xff] %vm454, %v453
  // Predicated region
  $region14: #{tpu_custom_call.1} parent=0 // pred_check
    %p456 = pneg %p11
  $region15: #{tpu_custom_call.1} parent=0 // pred_check_branch
    %458 = sbr.rel (%p456) target = $region17
  $region16: #{tpu_custom_call.1} parent=0 // pred_region
    %v459 = vld [vmem:[#allocation2] sm:$0xff]
    %v460 = vlog2.pop %v459
    %v461 = vmul.f32 %v460, 0.6931472
    %462 = vst.msk [vmem:[%s2] sm:$0xff] %vm454, %v461
  $region17: #{tpu_custom_call.1} parent=0 // pred_fallthru
    _
  // Predicated region
  $region18: #{tpu_custom_call.1} parent=0 // pred_check
    _
  $region19: #{tpu_custom_call.1} parent=0 // pred_check_branch
    %464 = sbr.rel (0) target = $region21
  $region20: #{tpu_custom_call.1} parent=0 // pred_region
    _
  $region21: #{tpu_custom_call.1} parent=0 // pred_fallthru
    _
  // Predicated region
  $region22: #{tpu_custom_call.1} parent=0 // pred_check
    _
  $region23: #{tpu_custom_call.1} parent=0 // pred_check_branch
    %466 = sbr.rel (0) target = $region25
  $region24: #{tpu_custom_call.1} parent=0 // pred_region
    _
  $region25: #{tpu_custom_call.1} parent=0 // pred_fallthru
    _

</llo_original>
